<compile_context>
chip_gen: v7x
topology: tpu7x:2x2x1
jax: 0.10.0
libtpu: 0.0.40
codegen_flags: <defaults>
</compile_context>

<pallas_src>
import functools
import math

import jax
import jax.numpy as jnp
from jax import lax
from jax.experimental import pallas as pl
from jax.experimental.pallas import tpu as pltpu


def _vmem_limit_bytes():
    """Per-generation scoped-VMEM budget (conservative fallback: 32 MiB)."""
    try:
        cap = int(pltpu.get_tpu_info().vmem_capacity_bytes)
        return max(32 * 1024 * 1024, min((cap * 3) // 4, 96 * 1024 * 1024))
    except Exception:
        return 32 * 1024 * 1024


# ---------------------------------------------------------------------------
# Stage 1: projection kernel  y = x @ W   (rows flattened, weight resident)
# ---------------------------------------------------------------------------
def _linear_kernel(x_ref, w_ref, y_ref):
    y_ref[...] = jnp.dot(x_ref[...], w_ref[...],
                         preferred_element_type=jnp.float32).astype(y_ref.dtype)


def _pick_row_tile(r, d, n, budget, cap=1024):
    for t in range(min(r, cap), 0, -1):
        if r % t:
            continue
        if t % 8 != 0 and t != r:
            continue
        if 2 * (t * d * 2 + d * n * 2 + t * n * 2) <= budget:
            return t
    return 8 if r % 8 == 0 else r


def _linear(x2d, w_t, budget, vmem_limit):
    """x2d: (R, D) bf16, w_t: (D, N) bf16 -> (R, N) bf16."""
    R, D = x2d.shape
    N = w_t.shape[1]
    TL = _pick_row_tile(R, D, N, budget)
    return pl.pallas_call(
        _linear_kernel,
        out_shape=jax.ShapeDtypeStruct((R, N), x2d.dtype),
        grid=(pl.cdiv(R, TL),),
        in_specs=[
            pl.BlockSpec((TL, D), lambda r: (r, 0)),
            pl.BlockSpec((D, N), lambda r: (0, 0)),      # weight stays resident
        ],
        out_specs=pl.BlockSpec((TL, N), lambda r: (r, 0)),
        compiler_params=pltpu.CompilerParams(
            dimension_semantics=("parallel",),
            vmem_limit_bytes=vmem_limit),
    )(x2d, w_t)


# ---------------------------------------------------------------------------
# Stage 2: attention kernel, grid = (batch, q-tile), heads folded in-kernel
# ---------------------------------------------------------------------------
def _attn_kernel(q_ref, k_ref, v_ref, mask_ref, aiw_ref, fc_ref, x_ref, p_ref,
                 *, n_heads, d_k, mask_heads, aiw_heads):
    ctx_parts = []
    for h in range(n_heads):                 # unrolled static head loop
        lo, hi = h * d_k, (h + 1) * d_k
        q_h = q_ref[0, :, lo:hi]             # (TQ, d_k) bf16, pre-scaled via W_Q
        k_h = k_ref[0, :, lo:hi]             # (Lk, d_k) bf16
        v_h = v_ref[0, :, lo:hi]             # (Lk, d_k) bf16

        # Scores on the MXU (bf16 operands, f32 accumulation), no transposes.
        s = lax.dot_general(q_h, k_h, (((1,), (1,)), ((), ())),
                            preferred_element_type=jnp.float32)

        # Single-select additive mask.  -inf keeps PyTorch semantics: a fully
        # masked row produces NaNs in p_attn, exactly like torch.
        s = jnp.where(mask_ref[0, h % mask_heads] != 0, -jnp.inf, s)

        # Softmax in f32; exact reciprocal (EUP) so rows sum to ~1.
        m = jnp.max(s, axis=-1, keepdims=True)
        e = jnp.exp(s - m)
        p = e * pl.reciprocal(jnp.sum(e, axis=-1, keepdims=True), approx=False)

        # TODO(synk): F.dropout is identity in eval mode; training-mode
        # stochastic dropout is intentionally not reproduced here.

        # Intent re-weighting and p_attn writeback for this head.
        p = p * aiw_ref[0, h % aiw_heads]
        p_ref[0, h] = p.astype(p_ref.dtype)

        # Per-head context (kept f32 until the fused projection).
        ctx_parts.append(jnp.dot(p.astype(v_h.dtype), v_h,
                                 preferred_element_type=jnp.float32))

    # Lane-concat the per-head contexts into one (TQ, D) slab and run a single
    # K = H*d_k output-projection matmul (full MXU fill vs per-head K=d_k).
    ctx = jnp.concatenate(ctx_parts, axis=-1)
    x_ref[0] = jnp.dot(ctx.astype(q_ref.dtype), fc_ref[...],
                       preferred_element_type=jnp.float32)


def _attn_step_bytes(tq, lk, d, h, hm, ha):
    per = (tq * d * 2            # q bf16
           + 2 * lk * d * 2      # k + v bf16
           + hm * tq * lk        # mask int8
           + ha * tq * lk * 4    # aiw f32
           + d * d * 2           # fc bf16
           + tq * d * 4          # x out f32
           + h * tq * lk * 4)    # p_attn out f32
    return 2 * per               # double buffering


def _pick_q_tile(lq, lk, d, h, hm, ha, budget, batch):
    cands = [t for t in range(lq, 0, -1)
             if lq % t == 0 and (t % 8 == 0 or t == lq)]
    fitting = [t for t in cands if _attn_step_bytes(t, lk, d, h, hm, ha) <= budget]
    if not fitting:
        fitting = cands[-1:]
    tq = fitting[0]
    # v7x megacore: prefer >=2 total grid steps so both TensorCores have work.
    if batch * (lq // tq) < 2:
        for t in fitting:
            if batch * (lq // t) >= 2:
                tq = t
                break
    return tq


def _attention(q_p, k_p, v_p, mask, aiw, fc_t, n_heads, d_k, vmem_limit, budget):
    B, Lq, D = q_p.shape
    Lk = k_p.shape[1]
    Bm, Hm = int(mask.shape[0]), int(mask.shape[1])
    Ba, Ha = int(aiw.shape[0]), int(aiw.shape[1])
    TQ = _pick_q_tile(Lq, Lk, D, n_heads, Hm, Ha, budget, B)
    n_qt = Lq // TQ

    def bcast_map(bdim):
        if bdim > 1:
            return lambda b, qi: (b, 0, qi, 0)
        return lambda b, qi: (0, 0, qi, 0)

    kernel = functools.partial(_attn_kernel, n_heads=n_heads, d_k=d_k,
                               mask_heads=Hm, aiw_heads=Ha)
    return pl.pallas_call(
        kernel,
        out_shape=(
            jax.ShapeDtypeStruct((B, Lq, D), jnp.float32),
            jax.ShapeDtypeStruct((B, n_heads, Lq, Lk), jnp.float32),
        ),
        grid=(B, n_qt),
        in_specs=[
            pl.BlockSpec((1, TQ, D), lambda b, qi: (b, qi, 0)),    # q (all heads)
            pl.BlockSpec((1, Lk, D), lambda b, qi: (b, 0, 0)),     # k: once / batch
            pl.BlockSpec((1, Lk, D), lambda b, qi: (b, 0, 0)),     # v: once / batch
            pl.BlockSpec((1, Hm, TQ, Lk), bcast_map(Bm)),          # mask int8
            pl.BlockSpec((1, Ha, TQ, Lk), bcast_map(Ba)),          # intent weights
            pl.BlockSpec((D, D), lambda b, qi: (0, 0)),            # fc (resident)
        ],
        out_specs=[
            pl.BlockSpec((1, TQ, D), lambda b, qi: (b, qi, 0)),            # x
            pl.BlockSpec((1, n_heads, TQ, Lk), lambda b, qi: (b, 0, qi, 0)),  # p
        ],
        compiler_params=pltpu.CompilerParams(
            dimension_semantics=("parallel", "parallel"),
            vmem_limit_bytes=vmem_limit),
    )(q_p, k_p, v_p, mask, aiw, fc_t)


# ---------------------------------------------------------------------------
# Public wrapper matching the torch module's forward (eval mode)
# ---------------------------------------------------------------------------
def multiheaded_attention(query, key, value, attn_mask, addition_intent_weights,
                          w_q, w_k, w_v, w_fc, n_heads):
    """query/key/value: (B, L, D) f32.  attn_mask: bool, broadcastable to
    (B, H, Lq, Lk) (True = masked).  addition_intent_weights: f32,
    broadcastable to (B, H, Lq, Lk) or None.  w_*: PyTorch (out, in) Linear
    weights.  Returns (x, p_attn)."""
    B, Lq, D = query.shape
    Lk = key.shape[1]
    d_k = D // n_heads
    scale = 1.0 / math.sqrt(d_k)
    cdt = jnp.bfloat16

    vmem_limit = _vmem_limit_bytes()
    budget = vmem_limit // 2

    # Pre-transpose Linear weights (y = x @ W^T); fold the 1/sqrt(d_k) score
    # scale into W_Q (free); cast MXU operands to bf16.
    wq_t = (jnp.asarray(w_q, jnp.float32).T * scale).astype(cdt)
    wk_t = jnp.asarray(w_k, jnp.float32).T.astype(cdt)
    wv_t = jnp.asarray(w_v, jnp.float32).T.astype(cdt)
    fc_t = jnp.asarray(w_fc, jnp.float32).T.astype(cdt)          # (D, D)

    if (query is key) and (key is value):
        # Self-attention: one fused (B*Lq, D) x (D, 3D) matmul.
        x2d = query.reshape(B * Lq, D).astype(cdt)
        w_qkv = jnp.concatenate([wq_t, wk_t, wv_t], axis=1)
        qkv = _linear(x2d, w_qkv, budget, vmem_limit)
        q_p = qkv[:, :D].reshape(B, Lq, D)
        k_p = qkv[:, D:2 * D].reshape(B, Lq, D)
        v_p = qkv[:, 2 * D:].reshape(B, Lq, D)
    else:
        q_p = _linear(query.reshape(B * Lq, D).astype(cdt), wq_t,
                      budget, vmem_limit).reshape(B, Lq, D)
        k_p = _linear(key.reshape(B * Lk, D).astype(cdt), wk_t,
                      budget, vmem_limit).reshape(B, Lk, D)
        v_p = _linear(value.reshape(B * Lk, D).astype(cdt), wv_t,
                      budget, vmem_limit).reshape(B, Lk, D)

    # Mask: keep broadcast batch/head dims small (DMA'd once instead of B*H x).
    m = jnp.asarray(attn_mask)
    while m.ndim < 4:
        m = m[None]
    Bm, Hm = int(m.shape[0]), int(m.shape[1])
    m = jnp.broadcast_to(m, (Bm, Hm, Lq, Lk)).astype(jnp.int8)

    if addition_intent_weights is None:
        aiw = jnp.ones((1, 1, Lq, Lk), jnp.float32)
    else:
        aiw = jnp.asarray(addition_intent_weights, jnp.float32)
        while aiw.ndim < 4:
            aiw = aiw[None]
    Ba, Ha = int(aiw.shape[0]), int(aiw.shape[1])
    aiw = jnp.broadcast_to(aiw, (Ba, Ha, Lq, Lk)).astype(jnp.float32)

    return _attention(q_p, k_p, v_p, m, aiw, fc_t, n_heads, d_k,
                      vmem_limit, budget)


# ---------------------------------------------------------------------------
# Pure-JAX f32 replica of the torch forward (eval mode) for the sanity check.
# ---------------------------------------------------------------------------
def _reference(query, key, value, attn_mask, aiw, w_q, w_k, w_v, w_fc, n_heads):
    B, Lq, D = query.shape
    d_k = D // n_heads

    def proj(x, w):
        y = x @ w.T
        return y.reshape(B, -1, n_heads, d_k).transpose(0, 2, 1, 3)

    q = proj(query, w_q); k = proj(key, w_k); v = proj(value, w_v)
    attn = jnp.einsum('bhqd,bhkd->bhqk', q, k) / math.sqrt(d_k)
    attn = attn + jnp.where(attn_mask, -jnp.inf, 0.0)
    p = jax.nn.softmax(attn, axis=-1)
    p = p * aiw
    x = jnp.einsum('bhqk,bhkd->bhqd', p, v)
    x = x.transpose(0, 2, 1, 3).reshape(B, Lq, D)
    x = x @ w_fc.T
    return x, p


if __name__ == "__main__":
    B, L, d_model, n_heads = 2, 384, 128, 4
    dropout_rate = 0.1  # eval mode -> no-op

    root = jax.random.PRNGKey(0)
    ks = jax.random.split(root, 8)

    query = jax.random.normal(ks[0], (B, L, d_model), jnp.float32)
    key_t = jax.random.normal(ks[1], (B, L, d_model), jnp.float32)
    value = jax.random.normal(ks[2], (B, L, d_model), jnp.float32)

    # Strictly-upper-triangular (causal) boolean mask; broadcast over batch/head
    # is expressed as a (1, 1, L, L) input (DMA'd once, not B*H times).
    causal = jnp.triu(jnp.ones((L, L), jnp.bool_), k=1)
    attn_mask = causal[None, None]

    aiw = jax.random.uniform(ks[3], (B, n_heads, L, L), jnp.float32,
                             minval=0.5, maxval=1.5)

    bound = 1.0 / math.sqrt(d_model)
    w_q = jax.random.uniform(ks[4], (d_model, d_model), jnp.float32, -bound, bound)
    w_k = jax.random.uniform(ks[5], (d_model, d_model), jnp.float32, -bound, bound)
    w_v = jax.random.uniform(ks[6], (d_model, d_model), jnp.float32, -bound, bound)
    w_fc = jax.random.uniform(ks[7], (d_model, d_model), jnp.float32, -bound, bound)

    # --- cross-attention path (separate Q/K/V projections) ---
    x, p_attn = multiheaded_attention(query, key_t, value, attn_mask, aiw,
                                      w_q, w_k, w_v, w_fc, n_heads)
    jax.block_until_ready((x, p_attn))
    x_ref, p_ref = _reference(query, key_t, value, attn_mask, aiw,
                              w_q, w_k, w_v, w_fc, n_heads)
    # bf16 MXU operands -> loosened tolerances vs. the f32 reference.
    assert jnp.allclose(x, x_ref, atol=5e-2, rtol=5e-2), "output mismatch"
    assert jnp.allclose(p_attn, p_ref, atol=2e-2, rtol=5e-2), "p_attn mismatch"

    # --- self-attention path (fused QKV projection) ---
    x2, p2 = multiheaded_attention(query, query, query, attn_mask, aiw,
                                   w_q, w_k, w_v, w_fc, n_heads)
    jax.block_until_ready((x2, p2))
    x2_ref, p2_ref = _reference(query, query, query, attn_mask, aiw,
                                w_q, w_k, w_v, w_fc, n_heads)
    assert jnp.allclose(x2, x2_ref, atol=5e-2, rtol=5e-2), "self-attn output mismatch"
    assert jnp.allclose(p2, p2_ref, atol=2e-2, rtol=5e-2), "self-attn p_attn mismatch"

    print("KERNEL_OK")
</pallas_src>

<mosaic_0001>
module attributes {stable_mosaic.version = 11 : i64} {
  func.func @_linear_kernel(%arg0: i32, %arg1: memref<768x128xbf16, #tpu.memory_space<vmem>>, %arg2: memref<128x128xbf16, #tpu.memory_space<vmem>>, %arg3: memref<768x128xbf16, #tpu.memory_space<vmem>>) attributes {dimension_semantics = [#tpu.dimension_semantics<parallel>], iteration_bounds = array<i64: 1>, scalar_prefetch = 0 : i64, scratch_operands = 0 : i64, tpu.core_type = #tpu.core_type<tc>, window_params = [{transform_indices = @transform_0, window_bounds = array<i64: 768, 128>}, {pipeline_mode = #tpu.pipeline_mode<synchronous>, transform_indices = @transform_1, window_bounds = array<i64: 128, 128>}, {transform_indices = @transform_2, window_bounds = array<i64: 768, 128>}]} {
    %c0 = arith.constant 0 : index
    %c0_0 = arith.constant 0 : index
    %0 = vector.load %arg1[%c0, %c0_0] : memref<768x128xbf16, #tpu.memory_space<vmem>>, vector<768x128xbf16>
    %c0_1 = arith.constant 0 : index
    %c0_2 = arith.constant 0 : index
    %1 = vector.load %arg2[%c0_1, %c0_2] : memref<128x128xbf16, #tpu.memory_space<vmem>>, vector<128x128xbf16>
    %cst = arith.constant dense<0.000000e+00> : vector<768x128xf32>
    %2 = tpu.matmul %0, %1, %cst {dimension_numbers = #tpu.dot_dimension_numbers<[1], [0], [0], [1], [0, 0, 1, 1], [], []>} : vector<768x128xbf16>, vector<128x128xbf16>, vector<768x128xf32> -> vector<768x128xf32>
    %3 = arith.truncf %2 : vector<768x128xf32> to vector<768x128xbf16>
    %c0_3 = arith.constant 0 : index
    %c0_4 = arith.constant 0 : index
    %4 = vector.load %arg3[%c0_3, %c0_4] : memref<768x128xbf16, #tpu.memory_space<vmem>>, vector<768x128xbf16>
    tpu.vector_store %arg3[%c0_3, %c0_4], %3 {strides = array<i32>} : memref<768x128xbf16, #tpu.memory_space<vmem>>, vector<768x128xbf16>,
    return
  }
  func.func @transform_0(%arg0: i32) -> (i32, i32) {
    %c0_i32 = arith.constant 0 : i32
    %c0_i32_0 = arith.constant 0 : i32
    return %arg0, %c0_i32 : i32, i32
  }
  func.func @transform_1(%arg0: i32) -> (i32, i32) {
    %c0_i32 = arith.constant 0 : i32
    %c0_i32_0 = arith.constant 0 : i32
    %c0_i32_1 = arith.constant 0 : i32
    return %c0_i32, %c0_i32_0 : i32, i32
  }
  func.func @transform_2(%arg0: i32) -> (i32, i32) {
    %c0_i32 = arith.constant 0 : i32
    %c0_i32_0 = arith.constant 0 : i32
    return %arg0, %c0_i32 : i32, i32
  }
}

</mosaic_0001>

<llo_original>
// kernel: tpu_custom_call.1
$region0: #{tpu_custom_call.1}
  #allocation0 [shape = 'u32[]', space=smem, size = 0x4, offset = 0x4, fixed_abs, tag = 'smem constant byte address 0x4 - core index']
  #allocation1 [shape = 'u32[144,128]{1,0:T(1,128)}', space=vmem, size = 0x12000, scoped, tag = 'internal scratch']
  %s0 = inlined_call_operand.hbm [shape: bf16[768,128], index: 0, kind: input, shape index: {}]
  %s1 = inlined_call_operand.hbm [shape: bf16[128,128], index: 1, kind: input, shape index: {}]
  %s2 = inlined_call_operand.hbm [shape: bf16[768,128], index: 2, kind: output, shape index: {}]
  %s3 = sld [smem:[#allocation0]]
  $region26: #{tpu_custom_call.1} parent=0
    _
  %s5 = ssub.s32 1, %s3
  %s6 = scalar_select 0, %s5, %s3
  $region1: #{tpu_custom_call.1} parent=0
    #allocation2 [shape = 'u8[196608]{0}', space=vmem, size = 0x30000, scoped, tag = 'input window, operand 0, single buffered']
    #allocation3 [shape = 's32[1]{0}', space=sflag, size = 0x4, scoped, tag = 'scoped memory for tpu_custom_call.1']
    #allocation4 [shape = 's32[1]{0}', space=sflag, size = 0x4, scoped, tag = 'scoped memory for tpu_custom_call.1']
    #allocation5 [shape = 'u8[32768]{0}', space=vmem, size = 0x8000, scoped, tag = 'input window, operand 1, single buffered']
    #allocation6 [shape = 's32[1]{0}', space=sflag, size = 0x4, scoped, tag = 'scoped memory for tpu_custom_call.1']
    #allocation7 [shape = 'u8[196608]{0}', space=vmem, size = 0x30000, scoped, tag = 'output window, operand 0, single buffered']
    %7 = vsyncpa [#allocation3], 0
    %8 = vsyncpa [#allocation6], 0
    %9 = vsyncpa [#allocation4], 0
    // Predicated region
    $region2: #{tpu_custom_call.1} parent=1 // pred_check
      _
    $region3: #{tpu_custom_call.1} parent=1 // pred_check_branch
      %11 = sbr.rel (0) target = $region5
    $region4: #{tpu_custom_call.1} parent=1 // pred_region
      %s13 = ssub.s32 6144, 6144
      %14 = vsyncadd [#allocation3], %s13
      %s15 = sshll.u32 [#allocation2], 4
      %s16 = int_to_ptr.vmem [resolvable:$true] %s15
      %21 = dma.hbm_to_vmem [thread:$0]  %s0, 6144, %s16, [#allocation3], 64, 64, 4
    $region5: #{tpu_custom_call.1} parent=1 // pred_fallthru
      _
    // Predicated region
    $region6: #{tpu_custom_call.1} parent=1 // pred_check
      _
    $region7: #{tpu_custom_call.1} parent=1 // pred_check_branch
      %23 = sbr.rel (0) target = $region9
    $region8: #{tpu_custom_call.1} parent=1 // pred_region
      %s25 = ssub.s32 1024, 1024
      %26 = vsyncadd [#allocation6], %s25
      %s27 = sshll.u32 [#allocation5], 4
      %s28 = int_to_ptr.vmem [resolvable:$true] %s27
      %33 = dma.hbm_to_vmem [thread:$0]  %s1, 1024, %s28, [#allocation6], 64, 64, 4
    $region9: #{tpu_custom_call.1} parent=1 // pred_fallthru
      _
    // Predicated region
    $region10: #{tpu_custom_call.1} parent=1 // pred_check
      _
    $region11: #{tpu_custom_call.1} parent=1 // pred_check_branch
      %35 = sbr.rel (0) target = $region13
    $region12: #{tpu_custom_call.1} parent=1 // pred_region
      %36 = dma.done [#allocation3], 6144
    $region13: #{tpu_custom_call.1} parent=1 // pred_fallthru
      _
    // Predicated region
    $region14: #{tpu_custom_call.1} parent=1 // pred_check
      _
    $region15: #{tpu_custom_call.1} parent=1 // pred_check_branch
      %38 = sbr.rel (0) target = $region17
    $region16: #{tpu_custom_call.1} parent=1 // pred_region
      %39 = dma.done [#allocation6], 1024
    $region17: #{tpu_custom_call.1} parent=1 // pred_fallthru
      _
    %v41 = vld [vmem:[#allocation2] sm:$0xf]
    %v42 = vld [vmem:[#allocation2 + $0x4] sm:$0xf]
    %v43 = vld [vmem:[#allocation2 + $0x8] sm:$0xf]
    %v44 = vld [vmem:[#allocation2 + $0xc] sm:$0xf]
    %v45 = vld [vmem:[#allocation2 + $0x10] sm:$0xf]
    %v46 = vld [vmem:[#allocation2 + $0x14] sm:$0xf]
    %v47 = vld [vmem:[#allocation2 + $0x18] sm:$0xf]
    %v48 = vld [vmem:[#allocation2 + $0x1c] sm:$0xf]
    %v49 = vld [vmem:[#allocation2 + $0x20] sm:$0xf]
    %v50 = vld [vmem:[#allocation2 + $0x24] sm:$0xf]
    %v51 = vld [vmem:[#allocation2 + $0x28] sm:$0xf]
    %v52 = vld [vmem:[#allocation2 + $0x2c] sm:$0xf]
    %v53 = vld [vmem:[#allocation2 + $0x30] sm:$0xf]
    %v54 = vld [vmem:[#allocation2 + $0x34] sm:$0xf]
    %v55 = vld [vmem:[#allocation2 + $0x38] sm:$0xf]
    %v56 = vld [vmem:[#allocation2 + $0x3c] sm:$0xf]
    %v57 = vld [vmem:[#allocation2 + $0x40] sm:$0xf]
    %v58 = vld [vmem:[#allocation2 + $0x44] sm:$0xf]
    %v59 = vld [vmem:[#allocation2 + $0x48] sm:$0xf]
    %v60 = vld [vmem:[#allocation2 + $0x4c] sm:$0xf]
    %v61 = vld [vmem:[#allocation2 + $0x50] sm:$0xf]
    %v62 = vld [vmem:[#allocation2 + $0x54] sm:$0xf]
    %v63 = vld [vmem:[#allocation2 + $0x58] sm:$0xf]
    %v64 = vld [vmem:[#allocation2 + $0x5c] sm:$0xf]
    %v65 = vld [vmem:[#allocation2 + $0x60] sm:$0xf]
    %v66 = vld [vmem:[#allocation2 + $0x64] sm:$0xf]
    %v67 = vld [vmem:[#allocation2 + $0x68] sm:$0xf]
    %v68 = vld [vmem:[#allocation2 + $0x6c] sm:$0xf]
    %v69 = vld [vmem:[#allocation2 + $0x70] sm:$0xf]
    %v70 = vld [vmem:[#allocation2 + $0x74] sm:$0xf]
    %v71 = vld [vmem:[#allocation2 + $0x78] sm:$0xf]
    %v72 = vld [vmem:[#allocation2 + $0x7c] sm:$0xf]
    %v73 = vld [vmem:[#allocation2 + $0x80] sm:$0xf]
    %v74 = vld [vmem:[#allocation2 + $0x84] sm:$0xf]
    %v75 = vld [vmem:[#allocation2 + $0x88] sm:$0xf]
    %v76 = vld [vmem:[#allocation2 + $0x8c] sm:$0xf]
    %v77 = vld [vmem:[#allocation2 + $0x90] sm:$0xf]
    %v78 = vld [vmem:[#allocation2 + $0x94] sm:$0xf]
    %v79 = vld [vmem:[#allocation2 + $0x98] sm:$0xf]
    %v80 = vld [vmem:[#allocation2 + $0x9c] sm:$0xf]
    %v81 = vld [vmem:[#allocation2 + $0xa0] sm:$0xf]
    %v82 = vld [vmem:[#allocation2 + $0xa4] sm:$0xf]
    %v83 = vld [vmem:[#allocation2 + $0xa8] sm:$0xf]
    %v84 = vld [vmem:[#allocation2 + $0xac] sm:$0xf]
    %v85 = vld [vmem:[#allocation2 + $0xb0] sm:$0xf]
    %v86 = vld [vmem:[#allocation2 + $0xb4] sm:$0xf]
    %v87 = vld [vmem:[#allocation2 + $0xb8] sm:$0xf]
    %v88 = vld [vmem:[#allocation2 + $0xbc] sm:$0xf]
    %v89 = vld [vmem:[#allocation2 + $0xc0] sm:$0xf]
    %v90 = vld [vmem:[#allocation2 + $0xc4] sm:$0xf]
    %v91 = vld [vmem:[#allocation2 + $0xc8] sm:$0xf]
    %v92 = vld [vmem:[#allocation2 + $0xcc] sm:$0xf]
    %v93 = vld [vmem:[#allocation2 + $0xd0] sm:$0xf]
    %v94 = vld [vmem:[#allocation2 + $0xd4] sm:$0xf]
    %v95 = vld [vmem:[#allocation2 + $0xd8] sm:$0xf]
    %v96 = vld [vmem:[#allocation2 + $0xdc] sm:$0xf]
    %v97 = vld [vmem:[#allocation2 + $0xe0] sm:$0xf]
    %v98 = vld [vmem:[#allocation2 + $0xe4] sm:$0xf]
    %v99 = vld [vmem:[#allocation2 + $0xe8] sm:$0xf]
    %v100 = vld [vmem:[#allocation2 + $0xec] sm:$0xf]
    %v101 = vld [vmem:[#allocation2 + $0xf0] sm:$0xf]
    %v102 = vld [vmem:[#allocation2 + $0xf4] sm:$0xf]
    %v103 = vld [vmem:[#allocation2 + $0xf8] sm:$0xf]
    %v104 = vld [vmem:[#allocation2 + $0xfc] sm:$0xf]
    %v105 = vld [vmem:[#allocation2 + $0x100] sm:$0xf]
    %v106 = vld [vmem:[#allocation2 + $0x104] sm:$0xf]
    %v107 = vld [vmem:[#allocation2 + $0x108] sm:$0xf]
    %v108 = vld [vmem:[#allocation2 + $0x10c] sm:$0xf]
    %v109 = vld [vmem:[#allocation2 + $0x110] sm:$0xf]
    %v110 = vld [vmem:[#allocation2 + $0x114] sm:$0xf]
    %v111 = vld [vmem:[#allocation2 + $0x118] sm:$0xf]
    %v112 = vld [vmem:[#allocation2 + $0x11c] sm:$0xf]
    %v113 = vld [vmem:[#allocation2 + $0x120] sm:$0xf]
    %v114 = vld [vmem:[#allocation2 + $0x124] sm:$0xf]
    %v115 = vld [vmem:[#allocation2 + $0x128] sm:$0xf]
    %v116 = vld [vmem:[#allocation2 + $0x12c] sm:$0xf]
    %v117 = vld [vmem:[#allocation2 + $0x130] sm:$0xf]
    %v118 = vld [vmem:[#allocation2 + $0x134] sm:$0xf]
    %v119 = vld [vmem:[#allocation2 + $0x138] sm:$0xf]
    %v120 = vld [vmem:[#allocation2 + $0x13c] sm:$0xf]
    %v121 = vld [vmem:[#allocation2 + $0x140] sm:$0xf]
    %v122 = vld [vmem:[#allocation2 + $0x144] sm:$0xf]
    %v123 = vld [vmem:[#allocation2 + $0x148] sm:$0xf]
    %v124 = vld [vmem:[#allocation2 + $0x14c] sm:$0xf]
    %v125 = vld [vmem:[#allocation2 + $0x150] sm:$0xf]
    %v126 = vld [vmem:[#allocation2 + $0x154] sm:$0xf]
    %v127 = vld [vmem:[#allocation2 + $0x158] sm:$0xf]
    %v128 = vld [vmem:[#allocation2 + $0x15c] sm:$0xf]
    %v129 = vld [vmem:[#allocation2 + $0x160] sm:$0xf]
    %v130 = vld [vmem:[#allocation2 + $0x164] sm:$0xf]
    %v131 = vld [vmem:[#allocation2 + $0x168] sm:$0xf]
    %v132 = vld [vmem:[#allocation2 + $0x16c] sm:$0xf]
    %v133 = vld [vmem:[#allocation2 + $0x170] sm:$0xf]
    %v134 = vld [vmem:[#allocation2 + $0x174] sm:$0xf]
    %v135 = vld [vmem:[#allocation2 + $0x178] sm:$0xf]
    %v136 = vld [vmem:[#allocation2 + $0x17c] sm:$0xf]
    %v137 = vld [vmem:[#allocation5] sm:$0xf]
    %v138 = vld [vmem:[#allocation5 + $0x4] sm:$0xf]
    %v139 = vld [vmem:[#allocation5 + $0x8] sm:$0xf]
    %v140 = vld [vmem:[#allocation5 + $0xc] sm:$0xf]
    %v141 = vld [vmem:[#allocation5 + $0x10] sm:$0xf]
    %v142 = vld [vmem:[#allocation5 + $0x14] sm:$0xf]
    %v143 = vld [vmem:[#allocation5 + $0x18] sm:$0xf]
    %v144 = vld [vmem:[#allocation5 + $0x1c] sm:$0xf]
    %v145 = vld [vmem:[#allocation5 + $0x20] sm:$0xf]
    %v146 = vld [vmem:[#allocation5 + $0x24] sm:$0xf]
    %v147 = vld [vmem:[#allocation5 + $0x28] sm:$0xf]
    %v148 = vld [vmem:[#allocation5 + $0x2c] sm:$0xf]
    %v149 = vld [vmem:[#allocation5 + $0x30] sm:$0xf]
    %v150 = vld [vmem:[#allocation5 + $0x34] sm:$0xf]
    %v151 = vld [vmem:[#allocation5 + $0x38] sm:$0xf]
    %v152 = vld [vmem:[#allocation5 + $0x3c] sm:$0xf]
    %v249 = vunpack.c.l.b16 %v41
    %v250 = vunpack.c.l.b16 %v42
    %v251 = vunpack.c.l.b16 %v43
    %v252 = vunpack.c.l.b16 %v44
    %v253 = vunpack.c.l.b16 %v45
    %v254 = vunpack.c.l.b16 %v46
    %v255 = vunpack.c.l.b16 %v47
    %v256 = vunpack.c.l.b16 %v48
    %v257 = vunpack.c.l.b16 %v49
    %v258 = vunpack.c.l.b16 %v50
    %v259 = vunpack.c.l.b16 %v51
    %v260 = vunpack.c.l.b16 %v52
    %v261 = vunpack.c.l.b16 %v53
    %v262 = vunpack.c.l.b16 %v54
    %v263 = vunpack.c.l.b16 %v55
    %v264 = vunpack.c.l.b16 %v56
    %v265 = vunpack.c.l.b16 %v57
    %v266 = vunpack.c.l.b16 %v58
    %v267 = vunpack.c.l.b16 %v59
    %v268 = vunpack.c.l.b16 %v60
    %v269 = vunpack.c.l.b16 %v61
    %v270 = vunpack.c.l.b16 %v62
    %v271 = vunpack.c.l.b16 %v63
    %v272 = vunpack.c.l.b16 %v64
    %v273 = vunpack.c.l.b16 %v65
    %v274 = vunpack.c.l.b16 %v66
    %v275 = vunpack.c.l.b16 %v67
    %v276 = vunpack.c.l.b16 %v68
    %v277 = vunpack.c.l.b16 %v69
    %v278 = vunpack.c.l.b16 %v70
    %v279 = vunpack.c.l.b16 %v71
    %v280 = vunpack.c.l.b16 %v72
    %v281 = vunpack.c.l.b16 %v73
    %v282 = vunpack.c.l.b16 %v74
    %v283 = vunpack.c.l.b16 %v75
    %v284 = vunpack.c.l.b16 %v76
    %v285 = vunpack.c.l.b16 %v77
    %v286 = vunpack.c.l.b16 %v78
    %v287 = vunpack.c.l.b16 %v79
    %v288 = vunpack.c.l.b16 %v80
    %v289 = vunpack.c.l.b16 %v81
    %v290 = vunpack.c.l.b16 %v82
    %v291 = vunpack.c.l.b16 %v83
    %v292 = vunpack.c.l.b16 %v84
    %v293 = vunpack.c.l.b16 %v85
    %v294 = vunpack.c.l.b16 %v86
    %v295 = vunpack.c.l.b16 %v87
    %v296 = vunpack.c.l.b16 %v88
    %v297 = vunpack.c.l.b16 %v89
    %v298 = vunpack.c.l.b16 %v90
    %v299 = vunpack.c.l.b16 %v91
    %v300 = vunpack.c.l.b16 %v92
    %v301 = vunpack.c.l.b16 %v93
    %v302 = vunpack.c.l.b16 %v94
    %v303 = vunpack.c.l.b16 %v95
    %v304 = vunpack.c.l.b16 %v96
    %v305 = vunpack.c.l.b16 %v97
    %v306 = vunpack.c.l.b16 %v98
    %v307 = vunpack.c.l.b16 %v99
    %v308 = vunpack.c.l.b16 %v100
    %v309 = vunpack.c.l.b16 %v101
    %v310 = vunpack.c.l.b16 %v102
    %v311 = vunpack.c.l.b16 %v103
    %v312 = vunpack.c.l.b16 %v104
    %v313 = vunpack.c.l.b16 %v105
    %v314 = vunpack.c.l.b16 %v106
    %v315 = vunpack.c.l.b16 %v107
    %v316 = vunpack.c.l.b16 %v108
    %v317 = vunpack.c.l.b16 %v109
    %v318 = vunpack.c.l.b16 %v110
    %v319 = vunpack.c.l.b16 %v111
    %v320 = vunpack.c.l.b16 %v112
    %v321 = vunpack.c.l.b16 %v113
    %v322 = vunpack.c.l.b16 %v114
    %v323 = vunpack.c.l.b16 %v115
    %v324 = vunpack.c.l.b16 %v116
    %v325 = vunpack.c.l.b16 %v117
    %v326 = vunpack.c.l.b16 %v118
    %v327 = vunpack.c.l.b16 %v119
    %v328 = vunpack.c.l.b16 %v120
    %v329 = vunpack.c.l.b16 %v121
    %v330 = vunpack.c.l.b16 %v122
    %v331 = vunpack.c.l.b16 %v123
    %v332 = vunpack.c.l.b16 %v124
    %v333 = vunpack.c.l.b16 %v125
    %v334 = vunpack.c.l.b16 %v126
    %v335 = vunpack.c.l.b16 %v127
    %v336 = vunpack.c.l.b16 %v128
    %v337 = vunpack.c.l.b16 %v129
    %v338 = vunpack.c.l.b16 %v130
    %v339 = vunpack.c.l.b16 %v131
    %v340 = vunpack.c.l.b16 %v132
    %v341 = vunpack.c.l.b16 %v133
    %v342 = vunpack.c.l.b16 %v134
    %v343 = vunpack.c.l.b16 %v135
    %v344 = vunpack.c.l.b16 %v136
    %v345 = vpack.c.b16 %v250, %v249
    %v346 = vpack.c.b16 %v252, %v251
    %v347 = vpack.c.b16 %v254, %v253
    %v348 = vpack.c.b16 %v256, %v255
    %v349 = vpack.c.b16 %v258, %v257
    %v350 = vpack.c.b16 %v260, %v259
    %v351 = vpack.c.b16 %v262, %v261
    %v352 = vpack.c.b16 %v264, %v263
    %v353 = vpack.c.b16 %v266, %v265
    %v354 = vpack.c.b16 %v268, %v267
    %v355 = vpack.c.b16 %v270, %v269
    %v356 = vpack.c.b16 %v272, %v271
    %v357 = vpack.c.b16 %v274, %v273
    %v358 = vpack.c.b16 %v276, %v275
    %v359 = vpack.c.b16 %v278, %v277
    %v360 = vpack.c.b16 %v280, %v279
    %v361 = vpack.c.b16 %v282, %v281
    %v362 = vpack.c.b16 %v284, %v283
    %v363 = vpack.c.b16 %v286, %v285
    %v364 = vpack.c.b16 %v288, %v287
    %v365 = vpack.c.b16 %v290, %v289
    %v366 = vpack.c.b16 %v292, %v291
    %v367 = vpack.c.b16 %v294, %v293
    %v368 = vpack.c.b16 %v296, %v295
    %v369 = vpack.c.b16 %v298, %v297
    %v370 = vpack.c.b16 %v300, %v299
    %v371 = vpack.c.b16 %v302, %v301
    %v372 = vpack.c.b16 %v304, %v303
    %v373 = vpack.c.b16 %v306, %v305
    %v374 = vpack.c.b16 %v308, %v307
    %v375 = vpack.c.b16 %v310, %v309
    %v376 = vpack.c.b16 %v312, %v311
    %v377 = vpack.c.b16 %v314, %v313
    %v378 = vpack.c.b16 %v316, %v315
    %v379 = vpack.c.b16 %v318, %v317
    %v380 = vpack.c.b16 %v320, %v319
    %v381 = vpack.c.b16 %v322, %v321
    %v382 = vpack.c.b16 %v324, %v323
    %v383 = vpack.c.b16 %v326, %v325
    %v384 = vpack.c.b16 %v328, %v327
    %v385 = vpack.c.b16 %v330, %v329
    %v386 = vpack.c.b16 %v332, %v331
    %v387 = vpack.c.b16 %v334, %v333
    %v388 = vpack.c.b16 %v336, %v335
    %v389 = vpack.c.b16 %v338, %v337
    %v390 = vpack.c.b16 %v340, %v339
    %v391 = vpack.c.b16 %v342, %v341
    %v392 = vpack.c.b16 %v344, %v343
    %v457 = vunpack.c.l.b16 %v137
    %v458 = vunpack.c.l.b16 %v138
    %v459 = vunpack.c.l.b16 %v139
    %v460 = vunpack.c.l.b16 %v140
    %v461 = vunpack.c.l.b16 %v141
    %v462 = vunpack.c.l.b16 %v142
    %v463 = vunpack.c.l.b16 %v143
    %v464 = vunpack.c.l.b16 %v144
    %v465 = vunpack.c.l.b16 %v145
    %v466 = vunpack.c.l.b16 %v146
    %v467 = vunpack.c.l.b16 %v147
    %v468 = vunpack.c.l.b16 %v148
    %v469 = vunpack.c.l.b16 %v149
    %v470 = vunpack.c.l.b16 %v150
    %v471 = vunpack.c.l.b16 %v151
    %v472 = vunpack.c.l.b16 %v152
    %v473 = vpack.c.b16 %v458, %v457
    %v474 = vpack.c.b16 %v460, %v459
    %v475 = vpack.c.b16 %v462, %v461
    %v476 = vpack.c.b16 %v464, %v463
    %v477 = vpack.c.b16 %v466, %v465
    %v478 = vpack.c.b16 %v468, %v467
    %v479 = vpack.c.b16 %v470, %v469
    %v480 = vpack.c.b16 %v472, %v471
    %489 = vmatprep.subr.bf16.mxu0 0
    %490 = vmatpush1.bf16.msra.mxu0 %v473
    %491 = vmatprep.subr.bf16.mxu0 0
    %492 = vmatpush1.bf16.msra.mxu0 %v474
    %493 = vmatprep.subr.bf16.mxu0 0
    %494 = vmatpush1.bf16.msra.mxu0 %v475
    %495 = vmatprep.subr.bf16.mxu0 0
    %496 = vmatpush1.bf16.msra.mxu0 %v476
    %497 = vmatprep.subr.bf16.mxu0 0
    %498 = vmatpush1.bf16.msra.mxu0 %v477
    %499 = vmatprep.subr.bf16.mxu0 0
    %500 = vmatpush1.bf16.msra.mxu0 %v478
    %501 = vmatprep.subr.bf16.mxu0 0
    %502 = vmatpush1.bf16.msra.mxu0 %v479
    %503 = vmatprep.subr.bf16.mxu0 0
    %504 = vmatpush1.bf16.msra.mxu0 %v480
    %505 = vmatprep.subr.bf16.mxu0 0
    %506 = vmatpush1.bf16.msra.mxu0 0
    %507 = vmatprep.subr.bf16.mxu0 0
    %508 = vmatpush1.bf16.msra.mxu0 0
    %509 = vmatprep.subr.bf16.mxu0 0
    %510 = vmatpush1.bf16.msra.mxu0 0
    %511 = vmatprep.subr.bf16.mxu0 0
    %512 = vmatpush1.bf16.msra.mxu0 0
    %513 = vmatprep.subr.bf16.mxu0 0
    %514 = vmatpush1.bf16.msra.mxu0 0
    %515 = vmatprep.subr.bf16.mxu0 0
    %516 = vmatpush1.bf16.msra.mxu0 0
    %517 = vmatprep.subr.bf16.mxu0 0
    %518 = vmatpush1.bf16.msra.mxu0 0
    %519 = vmatprep.subr.bf16.mxu0 0
    %520 = vmatpush1.bf16.msra.mxu0 0
    %521 = vmatprep.mubr.bf16.mxu0 0
    %522 = vmatmul.mubr.bf16.gmra.mrb[0].mxu0 %v345
    %v523 = vpop.f32.mrb[0].mxu0
    %v524 = vadd.f32 0.0, %v523
    %v525 = vpop.f32.mrb[0].mxu0
    %v526 = vpop.f32.mrb[0].mxu0
    %v527 = vadd.f32 0.0, %v526
    %v528 = vpop.f32.mrb[0].mxu0
    %529 = vmatprep.mubr.bf16.mxu0 0
    %530 = vmatmul.mubr.bf16.gmra.mrb[0].mxu0 %v346
    %v531 = vpop.f32.mrb[0].mxu0
    %v532 = vadd.f32 0.0, %v531
    %v533 = vpop.f32.mrb[0].mxu0
    %v534 = vpop.f32.mrb[0].mxu0
    %v535 = vadd.f32 0.0, %v534
    %v536 = vpop.f32.mrb[0].mxu0
    %537 = vmatprep.mubr.bf16.mxu0 0
    %538 = vmatmul.mubr.bf16.gmra.mrb[0].mxu0 %v347
    %v539 = vpop.f32.mrb[0].mxu0
    %v540 = vadd.f32 0.0, %v539
    %v541 = vpop.f32.mrb[0].mxu0
    %v542 = vpop.f32.mrb[0].mxu0
    %v543 = vadd.f32 0.0, %v542
    %v544 = vpop.f32.mrb[0].mxu0
    %545 = vmatprep.mubr.bf16.mxu0 0
    %546 = vmatmul.mubr.bf16.gmra.mrb[0].mxu0 %v348
    %v547 = vpop.f32.mrb[0].mxu0
    %v548 = vadd.f32 0.0, %v547
    %v549 = vpop.f32.mrb[0].mxu0
    %v550 = vpop.f32.mrb[0].mxu0
    %v551 = vadd.f32 0.0, %v550
    %v552 = vpop.f32.mrb[0].mxu0
    %553 = vmatprep.mubr.bf16.mxu0 0
    %554 = vmatmul.mubr.bf16.gmra.mrb[0].mxu0 %v349
    %v555 = vpop.f32.mrb[0].mxu0
    %v556 = vadd.f32 0.0, %v555
    %v557 = vpop.f32.mrb[0].mxu0
    %v558 = vpop.f32.mrb[0].mxu0
    %v559 = vadd.f32 0.0, %v558
    %v560 = vpop.f32.mrb[0].mxu0
    %561 = vmatprep.mubr.bf16.mxu0 0
    %562 = vmatmul.mubr.bf16.gmra.mrb[0].mxu0 %v350
    %v563 = vpop.f32.mrb[0].mxu0
    %v564 = vadd.f32 0.0, %v563
    %v565 = vpop.f32.mrb[0].mxu0
    %v566 = vpop.f32.mrb[0].mxu0
    %v567 = vadd.f32 0.0, %v566
    %v568 = vpop.f32.mrb[0].mxu0
    %569 = vmatprep.mubr.bf16.mxu0 0
    %570 = vmatmul.mubr.bf16.gmra.mrb[0].mxu0 %v351
    %v571 = vpop.f32.mrb[0].mxu0
    %v572 = vadd.f32 0.0, %v571
    %v573 = vpop.f32.mrb[0].mxu0
    %v574 = vpop.f32.mrb[0].mxu0
    %v575 = vadd.f32 0.0, %v574
    %v576 = vpop.f32.mrb[0].mxu0
    %577 = vmatprep.mubr.bf16.mxu0 0
    %578 = vmatmul.mubr.bf16.gmra.mrb[0].mxu0 %v352
    %v579 = vpop.f32.mrb[0].mxu0
    %v580 = vadd.f32 0.0, %v579
    %v581 = vpop.f32.mrb[0].mxu0
    %v582 = vpop.f32.mrb[0].mxu0
    %v583 = vadd.f32 0.0, %v582
    %v584 = vpop.f32.mrb[0].mxu0
    %585 = vmatprep.mubr.bf16.mxu0 0
    %586 = vmatmul.mubr.bf16.gmra.mrb[0].mxu0 %v353
    %v587 = vpop.f32.mrb[0].mxu0
    %v588 = vadd.f32 0.0, %v587
    %v589 = vpop.f32.mrb[0].mxu0
    %v590 = vpop.f32.mrb[0].mxu0
    %v591 = vadd.f32 0.0, %v590
    %v592 = vpop.f32.mrb[0].mxu0
    %593 = vmatprep.mubr.bf16.mxu0 0
    %594 = vmatmul.mubr.bf16.gmra.mrb[0].mxu0 %v354
    %v595 = vpop.f32.mrb[0].mxu0
    %v596 = vadd.f32 0.0, %v595
    %v597 = vpop.f32.mrb[0].mxu0
    %v598 = vpop.f32.mrb[0].mxu0
    %v599 = vadd.f32 0.0, %v598
    %v600 = vpop.f32.mrb[0].mxu0
    %601 = vmatprep.mubr.bf16.mxu0 0
    %602 = vmatmul.mubr.bf16.gmra.mrb[0].mxu0 %v355
    %v603 = vpop.f32.mrb[0].mxu0
    %v604 = vadd.f32 0.0, %v603
    %v605 = vpop.f32.mrb[0].mxu0
    %v606 = vpop.f32.mrb[0].mxu0
    %v607 = vadd.f32 0.0, %v606
    %v608 = vpop.f32.mrb[0].mxu0
    %609 = vmatprep.mubr.bf16.mxu0 0
    %610 = vmatmul.mubr.bf16.gmra.mrb[0].mxu0 %v356
    %v611 = vpop.f32.mrb[0].mxu0
    %v612 = vadd.f32 0.0, %v611
    %v613 = vpop.f32.mrb[0].mxu0
    %v614 = vpop.f32.mrb[0].mxu0
    %v615 = vadd.f32 0.0, %v614
    %v616 = vpop.f32.mrb[0].mxu0
    %617 = vmatprep.mubr.bf16.mxu0 0
    %618 = vmatmul.mubr.bf16.gmra.mrb[0].mxu0 %v357
    %v619 = vpop.f32.mrb[0].mxu0
    %v620 = vadd.f32 0.0, %v619
    %v621 = vpop.f32.mrb[0].mxu0
    %v622 = vpop.f32.mrb[0].mxu0
    %v623 = vadd.f32 0.0, %v622
    %v624 = vpop.f32.mrb[0].mxu0
    %625 = vmatprep.mubr.bf16.mxu0 0
    %626 = vmatmul.mubr.bf16.gmra.mrb[0].mxu0 %v358
    %v627 = vpop.f32.mrb[0].mxu0
    %v628 = vadd.f32 0.0, %v627
    %v629 = vpop.f32.mrb[0].mxu0
    %v630 = vpop.f32.mrb[0].mxu0
    %v631 = vadd.f32 0.0, %v630
    %v632 = vpop.f32.mrb[0].mxu0
    %633 = vmatprep.mubr.bf16.mxu0 0
    %634 = vmatmul.mubr.bf16.gmra.mrb[0].mxu0 %v359
    %v635 = vpop.f32.mrb[0].mxu0
    %v636 = vadd.f32 0.0, %v635
    %v637 = vpop.f32.mrb[0].mxu0
    %v638 = vpop.f32.mrb[0].mxu0
    %v639 = vadd.f32 0.0, %v638
    %v640 = vpop.f32.mrb[0].mxu0
    %641 = vmatprep.mubr.bf16.mxu0 0
    %642 = vmatmul.mubr.bf16.gmra.mrb[0].mxu0 %v360
    %v643 = vpop.f32.mrb[0].mxu0
    %v644 = vadd.f32 0.0, %v643
    %v645 = vpop.f32.mrb[0].mxu0
    %v646 = vpop.f32.mrb[0].mxu0
    %v647 = vadd.f32 0.0, %v646
    %v648 = vpop.f32.mrb[0].mxu0
    %649 = vmatprep.mubr.bf16.mxu0 0
    %650 = vmatmul.mubr.bf16.gmra.mrb[0].mxu0 %v361
    %v651 = vpop.f32.mrb[0].mxu0
    %v652 = vadd.f32 0.0, %v651
    %v653 = vpop.f32.mrb[0].mxu0
    %v654 = vpop.f32.mrb[0].mxu0
    %v655 = vadd.f32 0.0, %v654
    %v656 = vpop.f32.mrb[0].mxu0
    %657 = vmatprep.mubr.bf16.mxu0 0
    %658 = vmatmul.mubr.bf16.gmra.mrb[0].mxu0 %v362
    %v659 = vpop.f32.mrb[0].mxu0
    %v660 = vadd.f32 0.0, %v659
    %v661 = vpop.f32.mrb[0].mxu0
    %v662 = vpop.f32.mrb[0].mxu0
    %v663 = vadd.f32 0.0, %v662
    %v664 = vpop.f32.mrb[0].mxu0
    %665 = vmatprep.mubr.bf16.mxu0 0
    %666 = vmatmul.mubr.bf16.gmra.mrb[0].mxu0 %v363
    %v667 = vpop.f32.mrb[0].mxu0
    %v668 = vadd.f32 0.0, %v667
    %v669 = vpop.f32.mrb[0].mxu0
    %v670 = vpop.f32.mrb[0].mxu0
    %v671 = vadd.f32 0.0, %v670
    %v672 = vpop.f32.mrb[0].mxu0
    %673 = vmatprep.mubr.bf16.mxu0 0
    %674 = vmatmul.mubr.bf16.gmra.mrb[0].mxu0 %v364
    %v675 = vpop.f32.mrb[0].mxu0
    %v676 = vadd.f32 0.0, %v675
    %v677 = vpop.f32.mrb[0].mxu0
    %v678 = vpop.f32.mrb[0].mxu0
    %v679 = vadd.f32 0.0, %v678
    %v680 = vpop.f32.mrb[0].mxu0
    %681 = vmatprep.mubr.bf16.mxu0 0
    %682 = vmatmul.mubr.bf16.gmra.mrb[0].mxu0 %v365
    %v683 = vpop.f32.mrb[0].mxu0
    %v684 = vadd.f32 0.0, %v683
    %v685 = vpop.f32.mrb[0].mxu0
    %v686 = vpop.f32.mrb[0].mxu0
    %v687 = vadd.f32 0.0, %v686
    %v688 = vpop.f32.mrb[0].mxu0
    %689 = vmatprep.mubr.bf16.mxu0 0
    %690 = vmatmul.mubr.bf16.gmra.mrb[0].mxu0 %v366
    %v691 = vpop.f32.mrb[0].mxu0
    %v692 = vadd.f32 0.0, %v691
    %v693 = vpop.f32.mrb[0].mxu0
    %v694 = vpop.f32.mrb[0].mxu0
    %v695 = vadd.f32 0.0, %v694
    %v696 = vpop.f32.mrb[0].mxu0
    %697 = vmatprep.mubr.bf16.mxu0 0
    %698 = vmatmul.mubr.bf16.gmra.mrb[0].mxu0 %v367
    %v699 = vpop.f32.mrb[0].mxu0
    %v700 = vadd.f32 0.0, %v699
    %v701 = vpop.f32.mrb[0].mxu0
    %v702 = vpop.f32.mrb[0].mxu0
    %v703 = vadd.f32 0.0, %v702
    %v704 = vpop.f32.mrb[0].mxu0
    %705 = vmatprep.mubr.bf16.mxu0 0
    %706 = vmatmul.mubr.bf16.gmra.mrb[0].mxu0 %v368
    %v707 = vpop.f32.mrb[0].mxu0
    %v708 = vadd.f32 0.0, %v707
    %v709 = vpop.f32.mrb[0].mxu0
    %v710 = vpop.f32.mrb[0].mxu0
    %v711 = vadd.f32 0.0, %v710
    %v712 = vpop.f32.mrb[0].mxu0
    %713 = vmatprep.mubr.bf16.mxu0 0
    %714 = vmatmul.mubr.bf16.gmra.mrb[0].mxu0 %v369
    %v715 = vpop.f32.mrb[0].mxu0
    %v716 = vadd.f32 0.0, %v715
    %v717 = vpop.f32.mrb[0].mxu0
    %v718 = vpop.f32.mrb[0].mxu0
    %v719 = vadd.f32 0.0, %v718
    %v720 = vpop.f32.mrb[0].mxu0
    %721 = vmatprep.mubr.bf16.mxu0 0
    %722 = vmatmul.mubr.bf16.gmra.mrb[0].mxu0 %v370
    %v723 = vpop.f32.mrb[0].mxu0
    %v724 = vadd.f32 0.0, %v723
    %v725 = vpop.f32.mrb[0].mxu0
    %v726 = vpop.f32.mrb[0].mxu0
    %v727 = vadd.f32 0.0, %v726
    %v728 = vpop.f32.mrb[0].mxu0
    %729 = vmatprep.mubr.bf16.mxu0 0
    %730 = vmatmul.mubr.bf16.gmra.mrb[0].mxu0 %v371
    %v731 = vpop.f32.mrb[0].mxu0
    %v732 = vadd.f32 0.0, %v731
    %v733 = vpop.f32.mrb[0].mxu0
    %v734 = vpop.f32.mrb[0].mxu0
    %v735 = vadd.f32 0.0, %v734
    %v736 = vpop.f32.mrb[0].mxu0
    %737 = vmatprep.mubr.bf16.mxu0 0
    %738 = vmatmul.mubr.bf16.gmra.mrb[0].mxu0 %v372
    %v739 = vpop.f32.mrb[0].mxu0
    %v740 = vadd.f32 0.0, %v739
    %v741 = vpop.f32.mrb[0].mxu0
    %v742 = vpop.f32.mrb[0].mxu0
    %v743 = vadd.f32 0.0, %v742
    %v744 = vpop.f32.mrb[0].mxu0
    %745 = vmatprep.mubr.bf16.mxu0 0
    %746 = vmatmul.mubr.bf16.gmra.mrb[0].mxu0 %v373
    %v747 = vpop.f32.mrb[0].mxu0
    %v748 = vadd.f32 0.0, %v747
    %v749 = vpop.f32.mrb[0].mxu0
    %v750 = vpop.f32.mrb[0].mxu0
    %v751 = vadd.f32 0.0, %v750
    %v752 = vpop.f32.mrb[0].mxu0
    %753 = vmatprep.mubr.bf16.mxu0 0
    %754 = vmatmul.mubr.bf16.gmra.mrb[0].mxu0 %v374
    %v755 = vpop.f32.mrb[0].mxu0
    %v756 = vadd.f32 0.0, %v755
    %v757 = vpop.f32.mrb[0].mxu0
    %v758 = vpop.f32.mrb[0].mxu0
    %v759 = vadd.f32 0.0, %v758
    %v760 = vpop.f32.mrb[0].mxu0
    %761 = vmatprep.mubr.bf16.mxu0 0
    %762 = vmatmul.mubr.bf16.gmra.mrb[0].mxu0 %v375
    %v763 = vpop.f32.mrb[0].mxu0
    %v764 = vadd.f32 0.0, %v763
    %v765 = vpop.f32.mrb[0].mxu0
    %v766 = vpop.f32.mrb[0].mxu0
    %v767 = vadd.f32 0.0, %v766
    %v768 = vpop.f32.mrb[0].mxu0
    %769 = vmatprep.mubr.bf16.mxu0 0
    %770 = vmatmul.mubr.bf16.gmra.mrb[0].mxu0 %v376
    %v771 = vpop.f32.mrb[0].mxu0
    %v772 = vadd.f32 0.0, %v771
    %v773 = vpop.f32.mrb[0].mxu0
    %v774 = vpop.f32.mrb[0].mxu0
    %v775 = vadd.f32 0.0, %v774
    %v776 = vpop.f32.mrb[0].mxu0
    %777 = vmatprep.mubr.bf16.mxu0 0
    %778 = vmatmul.mubr.bf16.gmra.mrb[0].mxu0 %v377
    %v779 = vpop.f32.mrb[0].mxu0
    %v780 = vadd.f32 0.0, %v779
    %v781 = vpop.f32.mrb[0].mxu0
    %v782 = vpop.f32.mrb[0].mxu0
    %v783 = vadd.f32 0.0, %v782
    %v784 = vpop.f32.mrb[0].mxu0
    %785 = vmatprep.mubr.bf16.mxu0 0
    %786 = vmatmul.mubr.bf16.gmra.mrb[0].mxu0 %v378
    %v787 = vpop.f32.mrb[0].mxu0
    %v788 = vadd.f32 0.0, %v787
    %v789 = vpop.f32.mrb[0].mxu0
    %v790 = vpop.f32.mrb[0].mxu0
    %v791 = vadd.f32 0.0, %v790
    %v792 = vpop.f32.mrb[0].mxu0
    %793 = vmatprep.mubr.bf16.mxu0 0
    %794 = vmatmul.mubr.bf16.gmra.mrb[0].mxu0 %v379
    %v795 = vpop.f32.mrb[0].mxu0
    %v796 = vadd.f32 0.0, %v795
    %v797 = vpop.f32.mrb[0].mxu0
    %v798 = vpop.f32.mrb[0].mxu0
    %v799 = vadd.f32 0.0, %v798
    %v800 = vpop.f32.mrb[0].mxu0
    %801 = vmatprep.mubr.bf16.mxu0 0
    %802 = vmatmul.mubr.bf16.gmra.mrb[0].mxu0 %v380
    %v803 = vpop.f32.mrb[0].mxu0
    %v804 = vadd.f32 0.0, %v803
    %v805 = vpop.f32.mrb[0].mxu0
    %v806 = vpop.f32.mrb[0].mxu0
    %v807 = vadd.f32 0.0, %v806
    %v808 = vpop.f32.mrb[0].mxu0
    %809 = vmatprep.mubr.bf16.mxu0 0
    %810 = vmatmul.mubr.bf16.gmra.mrb[0].mxu0 %v381
    %v811 = vpop.f32.mrb[0].mxu0
    %v812 = vadd.f32 0.0, %v811
    %v813 = vpop.f32.mrb[0].mxu0
    %v814 = vpop.f32.mrb[0].mxu0
    %v815 = vadd.f32 0.0, %v814
    %v816 = vpop.f32.mrb[0].mxu0
    %817 = vmatprep.mubr.bf16.mxu0 0
    %818 = vmatmul.mubr.bf16.gmra.mrb[0].mxu0 %v382
    %v819 = vpop.f32.mrb[0].mxu0
    %v820 = vadd.f32 0.0, %v819
    %v821 = vpop.f32.mrb[0].mxu0
    %v822 = vpop.f32.mrb[0].mxu0
    %v823 = vadd.f32 0.0, %v822
    %v824 = vpop.f32.mrb[0].mxu0
    %825 = vmatprep.mubr.bf16.mxu0 0
    %826 = vmatmul.mubr.bf16.gmra.mrb[0].mxu0 %v383
    %v827 = vpop.f32.mrb[0].mxu0
    %v828 = vadd.f32 0.0, %v827
    %v829 = vpop.f32.mrb[0].mxu0
    %v830 = vpop.f32.mrb[0].mxu0
    %v831 = vadd.f32 0.0, %v830
    %v832 = vpop.f32.mrb[0].mxu0
    %833 = vmatprep.mubr.bf16.mxu0 0
    %834 = vmatmul.mubr.bf16.gmra.mrb[0].mxu0 %v384
    %v835 = vpop.f32.mrb[0].mxu0
    %v836 = vadd.f32 0.0, %v835
    %v837 = vpop.f32.mrb[0].mxu0
    %v838 = vpop.f32.mrb[0].mxu0
    %v839 = vadd.f32 0.0, %v838
    %v840 = vpop.f32.mrb[0].mxu0
    %841 = vmatprep.mubr.bf16.mxu0 0
    %842 = vmatmul.mubr.bf16.gmra.mrb[0].mxu0 %v385
    %v843 = vpop.f32.mrb[0].mxu0
    %v844 = vadd.f32 0.0, %v843
    %v845 = vpop.f32.mrb[0].mxu0
    %v846 = vpop.f32.mrb[0].mxu0
    %v847 = vadd.f32 0.0, %v846
    %v848 = vpop.f32.mrb[0].mxu0
    %849 = vmatprep.mubr.bf16.mxu0 0
    %850 = vmatmul.mubr.bf16.gmra.mrb[0].mxu0 %v386
    %v851 = vpop.f32.mrb[0].mxu0
    %v852 = vadd.f32 0.0, %v851
    %v853 = vpop.f32.mrb[0].mxu0
    %v854 = vpop.f32.mrb[0].mxu0
    %v855 = vadd.f32 0.0, %v854
    %v856 = vpop.f32.mrb[0].mxu0
    %857 = vmatprep.mubr.bf16.mxu0 0
    %858 = vmatmul.mubr.bf16.gmra.mrb[0].mxu0 %v387
    %v859 = vpop.f32.mrb[0].mxu0
    %v860 = vadd.f32 0.0, %v859
    %v861 = vpop.f32.mrb[0].mxu0
    %v862 = vpop.f32.mrb[0].mxu0
    %v863 = vadd.f32 0.0, %v862
    %v864 = vpop.f32.mrb[0].mxu0
    %865 = vmatprep.mubr.bf16.mxu0 0
    %866 = vmatmul.mubr.bf16.gmra.mrb[0].mxu0 %v388
    %v867 = vpop.f32.mrb[0].mxu0
    %v868 = vadd.f32 0.0, %v867
    %v869 = vpop.f32.mrb[0].mxu0
    %v870 = vpop.f32.mrb[0].mxu0
    %v871 = vadd.f32 0.0, %v870
    %v872 = vpop.f32.mrb[0].mxu0
    %873 = vmatprep.mubr.bf16.mxu0 0
    %874 = vmatmul.mubr.bf16.gmra.mrb[0].mxu0 %v389
    %v875 = vpop.f32.mrb[0].mxu0
    %v876 = vadd.f32 0.0, %v875
    %v877 = vpop.f32.mrb[0].mxu0
    %v878 = vpop.f32.mrb[0].mxu0
    %v879 = vadd.f32 0.0, %v878
    %v880 = vpop.f32.mrb[0].mxu0
    %881 = vmatprep.mubr.bf16.mxu0 0
    %882 = vmatmul.mubr.bf16.gmra.mrb[0].mxu0 %v390
    %v883 = vpop.f32.mrb[0].mxu0
    %v884 = vadd.f32 0.0, %v883
    %v885 = vpop.f32.mrb[0].mxu0
    %v886 = vpop.f32.mrb[0].mxu0
    %v887 = vadd.f32 0.0, %v886
    %v888 = vpop.f32.mrb[0].mxu0
    %889 = vmatprep.mubr.bf16.mxu0 0
    %890 = vmatmul.mubr.bf16.gmra.mrb[0].mxu0 %v391
    %v891 = vpop.f32.mrb[0].mxu0
    %v892 = vadd.f32 0.0, %v891
    %v893 = vpop.f32.mrb[0].mxu0
    %v894 = vpop.f32.mrb[0].mxu0
    %v895 = vadd.f32 0.0, %v894
    %v896 = vpop.f32.mrb[0].mxu0
    %897 = vmatprep.mubr.bf16.mxu0 0
    %898 = vmatmul.mubr.bf16.gmra.mrb[0].mxu0 %v392
    %v899 = vpop.f32.mrb[0].mxu0
    %v900 = vadd.f32 0.0, %v899
    %v901 = vpop.f32.mrb[0].mxu0
    %v902 = vpop.f32.mrb[0].mxu0
    %v903 = vadd.f32 0.0, %v902
    %v904 = vpop.f32.mrb[0].mxu0
    %905 = vdwg.mxu0
    %v906 = vpack.c.bf16 %v527, %v524
    %v907 = vpack.c.bf16 %v535, %v532
    %v908 = vpack.c.bf16 %v543, %v540
    %v909 = vpack.c.bf16 %v551, %v548
    %v910 = vpack.c.bf16 %v559, %v556
    %v911 = vpack.c.bf16 %v567, %v564
    %v912 = vpack.c.bf16 %v575, %v572
    %v913 = vpack.c.bf16 %v583, %v580
    %v914 = vpack.c.bf16 %v591, %v588
    %v915 = vpack.c.bf16 %v599, %v596
    %v916 = vpack.c.bf16 %v607, %v604
    %v917 = vpack.c.bf16 %v615, %v612
    %v918 = vpack.c.bf16 %v623, %v620
    %v919 = vpack.c.bf16 %v631, %v628
    %v920 = vpack.c.bf16 %v639, %v636
    %v921 = vpack.c.bf16 %v647, %v644
    %v922 = vpack.c.bf16 %v655, %v652
    %v923 = vpack.c.bf16 %v663, %v660
    %v924 = vpack.c.bf16 %v671, %v668
    %v925 = vpack.c.bf16 %v679, %v676
    %v926 = vpack.c.bf16 %v687, %v684
    %v927 = vpack.c.bf16 %v695, %v692
    %v928 = vpack.c.bf16 %v703, %v700
    %v929 = vpack.c.bf16 %v711, %v708
    %v930 = vpack.c.bf16 %v719, %v716
    %v931 = vpack.c.bf16 %v727, %v724
    %v932 = vpack.c.bf16 %v735, %v732
    %v933 = vpack.c.bf16 %v743, %v740
    %v934 = vpack.c.bf16 %v751, %v748
    %v935 = vpack.c.bf16 %v759, %v756
    %v936 = vpack.c.bf16 %v767, %v764
    %v937 = vpack.c.bf16 %v775, %v772
    %v938 = vpack.c.bf16 %v783, %v780
    %v939 = vpack.c.bf16 %v791, %v788
    %v940 = vpack.c.bf16 %v799, %v796
    %v941 = vpack.c.bf16 %v807, %v804
    %v942 = vpack.c.bf16 %v815, %v812
    %v943 = vpack.c.bf16 %v823, %v820
    %v944 = vpack.c.bf16 %v831, %v828
    %v945 = vpack.c.bf16 %v839, %v836
    %v946 = vpack.c.bf16 %v847, %v844
    %v947 = vpack.c.bf16 %v855, %v852
    %v948 = vpack.c.bf16 %v863, %v860
    %v949 = vpack.c.bf16 %v871, %v868
    %v950 = vpack.c.bf16 %v879, %v876
    %v951 = vpack.c.bf16 %v887, %v884
    %v952 = vpack.c.bf16 %v895, %v892
    %v953 = vpack.c.bf16 %v903, %v900
    %v1002 = vunpack.c.l.b16 %v906
    %v1003 = vunpack.c.h.b16 %v906
    %v1004 = vunpack.c.l.b16 %v907
    %v1005 = vunpack.c.h.b16 %v907
    %v1006 = vunpack.c.l.b16 %v908
    %v1007 = vunpack.c.h.b16 %v908
    %v1008 = vunpack.c.l.b16 %v909
    %v1009 = vunpack.c.h.b16 %v909
    %v1010 = vunpack.c.l.b16 %v910
    %v1011 = vunpack.c.h.b16 %v910
    %v1012 = vunpack.c.l.b16 %v911
    %v1013 = vunpack.c.h.b16 %v911
    %v1014 = vunpack.c.l.b16 %v912
    %v1015 = vunpack.c.h.b16 %v912
    %v1016 = vunpack.c.l.b16 %v913
    %v1017 = vunpack.c.h.b16 %v913
    %v1018 = vunpack.c.l.b16 %v914
    %v1019 = vunpack.c.h.b16 %v914
    %v1020 = vunpack.c.l.b16 %v915
    %v1021 = vunpack.c.h.b16 %v915
    %v1022 = vunpack.c.l.b16 %v916
    %v1023 = vunpack.c.h.b16 %v916
    %v1024 = vunpack.c.l.b16 %v917
    %v1025 = vunpack.c.h.b16 %v917
    %v1026 = vunpack.c.l.b16 %v918
    %v1027 = vunpack.c.h.b16 %v918
    %v1028 = vunpack.c.l.b16 %v919
    %v1029 = vunpack.c.h.b16 %v919
    %v1030 = vunpack.c.l.b16 %v920
    %v1031 = vunpack.c.h.b16 %v920
    %v1032 = vunpack.c.l.b16 %v921
    %v1033 = vunpack.c.h.b16 %v921
    %v1034 = vunpack.c.l.b16 %v922
    %v1035 = vunpack.c.h.b16 %v922
    %v1036 = vunpack.c.l.b16 %v923
    %v1037 = vunpack.c.h.b16 %v923
    %v1038 = vunpack.c.l.b16 %v924
    %v1039 = vunpack.c.h.b16 %v924
    %v1040 = vunpack.c.l.b16 %v925
    %v1041 = vunpack.c.h.b16 %v925
    %v1042 = vunpack.c.l.b16 %v926
    %v1043 = vunpack.c.h.b16 %v926
    %v1044 = vunpack.c.l.b16 %v927
    %v1045 = vunpack.c.h.b16 %v927
    %v1046 = vunpack.c.l.b16 %v928
    %v1047 = vunpack.c.h.b16 %v928
    %v1048 = vunpack.c.l.b16 %v929
    %v1049 = vunpack.c.h.b16 %v929
    %v1050 = vunpack.c.l.b16 %v930
    %v1051 = vunpack.c.h.b16 %v930
    %v1052 = vunpack.c.l.b16 %v931
    %v1053 = vunpack.c.h.b16 %v931
    %v1054 = vunpack.c.l.b16 %v932
    %v1055 = vunpack.c.h.b16 %v932
    %v1056 = vunpack.c.l.b16 %v933
    %v1057 = vunpack.c.h.b16 %v933
    %v1058 = vunpack.c.l.b16 %v934
    %v1059 = vunpack.c.h.b16 %v934
    %v1060 = vunpack.c.l.b16 %v935
    %v1061 = vunpack.c.h.b16 %v935
    %v1062 = vunpack.c.l.b16 %v936
    %v1063 = vunpack.c.h.b16 %v936
    %v1064 = vunpack.c.l.b16 %v937
    %v1065 = vunpack.c.h.b16 %v937
    %v1066 = vunpack.c.l.b16 %v938
    %v1067 = vunpack.c.h.b16 %v938
    %v1068 = vunpack.c.l.b16 %v939
    %v1069 = vunpack.c.h.b16 %v939
    %v1070 = vunpack.c.l.b16 %v940
    %v1071 = vunpack.c.h.b16 %v940
    %v1072 = vunpack.c.l.b16 %v941
    %v1073 = vunpack.c.h.b16 %v941
    %v1074 = vunpack.c.l.b16 %v942
    %v1075 = vunpack.c.h.b16 %v942
    %v1076 = vunpack.c.l.b16 %v943
    %v1077 = vunpack.c.h.b16 %v943
    %v1078 = vunpack.c.l.b16 %v944
    %v1079 = vunpack.c.h.b16 %v944
    %v1080 = vunpack.c.l.b16 %v945
    %v1081 = vunpack.c.h.b16 %v945
    %v1082 = vunpack.c.l.b16 %v946
    %v1083 = vunpack.c.h.b16 %v946
    %v1084 = vunpack.c.l.b16 %v947
    %v1085 = vunpack.c.h.b16 %v947
    %v1086 = vunpack.c.l.b16 %v948
    %v1087 = vunpack.c.h.b16 %v948
    %v1088 = vunpack.c.l.b16 %v949
    %v1089 = vunpack.c.h.b16 %v949
    %v1090 = vunpack.c.l.b16 %v950
    %v1091 = vunpack.c.h.b16 %v950
    %v1092 = vunpack.c.l.b16 %v951
    %v1093 = vunpack.c.h.b16 %v951
    %v1094 = vunpack.c.l.b16 %v952
    %v1095 = vunpack.c.h.b16 %v952
    %v1096 = vunpack.c.l.b16 %v953
    %v1097 = vunpack.c.h.b16 %v953
    %v1098 = vpack.c.b16 %v1002, %v1002
    %v1099 = vpack.c.b16 %v1003, %v1003
    %v1100 = vpack.c.b16 %v1004, %v1004
    %v1101 = vpack.c.b16 %v1005, %v1005
    %v1102 = vpack.c.b16 %v1006, %v1006
    %v1103 = vpack.c.b16 %v1007, %v1007
    %v1104 = vpack.c.b16 %v1008, %v1008
    %v1105 = vpack.c.b16 %v1009, %v1009
    %v1106 = vpack.c.b16 %v1010, %v1010
    %v1107 = vpack.c.b16 %v1011, %v1011
    %v1108 = vpack.c.b16 %v1012, %v1012
    %v1109 = vpack.c.b16 %v1013, %v1013
    %v1110 = vpack.c.b16 %v1014, %v1014
    %v1111 = vpack.c.b16 %v1015, %v1015
    %v1112 = vpack.c.b16 %v1016, %v1016
    %v1113 = vpack.c.b16 %v1017, %v1017
    %v1114 = vpack.c.b16 %v1018, %v1018
    %v1115 = vpack.c.b16 %v1019, %v1019
    %v1116 = vpack.c.b16 %v1020, %v1020
    %v1117 = vpack.c.b16 %v1021, %v1021
    %v1118 = vpack.c.b16 %v1022, %v1022
    %v1119 = vpack.c.b16 %v1023, %v1023
    %v1120 = vpack.c.b16 %v1024, %v1024
    %v1121 = vpack.c.b16 %v1025, %v1025
    %v1122 = vpack.c.b16 %v1026, %v1026
    %v1123 = vpack.c.b16 %v1027, %v1027
    %v1124 = vpack.c.b16 %v1028, %v1028
    %v1125 = vpack.c.b16 %v1029, %v1029
    %v1126 = vpack.c.b16 %v1030, %v1030
    %v1127 = vpack.c.b16 %v1031, %v1031
    %v1128 = vpack.c.b16 %v1032, %v1032
    %v1129 = vpack.c.b16 %v1033, %v1033
    %v1130 = vpack.c.b16 %v1034, %v1034
    %v1131 = vpack.c.b16 %v1035, %v1035
    %v1132 = vpack.c.b16 %v1036, %v1036
    %v1133 = vpack.c.b16 %v1037, %v1037
    %v1134 = vpack.c.b16 %v1038, %v1038
    %v1135 = vpack.c.b16 %v1039, %v1039
    %v1136 = vpack.c.b16 %v1040, %v1040
    %v1137 = vpack.c.b16 %v1041, %v1041
    %v1138 = vpack.c.b16 %v1042, %v1042
    %v1139 = vpack.c.b16 %v1043, %v1043
    %v1140 = vpack.c.b16 %v1044, %v1044
    %v1141 = vpack.c.b16 %v1045, %v1045
    %v1142 = vpack.c.b16 %v1046, %v1046
    %v1143 = vpack.c.b16 %v1047, %v1047
    %v1144 = vpack.c.b16 %v1048, %v1048
    %v1145 = vpack.c.b16 %v1049, %v1049
    %v1146 = vpack.c.b16 %v1050, %v1050
    %v1147 = vpack.c.b16 %v1051, %v1051
    %v1148 = vpack.c.b16 %v1052, %v1052
    %v1149 = vpack.c.b16 %v1053, %v1053
    %v1150 = vpack.c.b16 %v1054, %v1054
    %v1151 = vpack.c.b16 %v1055, %v1055
    %v1152 = vpack.c.b16 %v1056, %v1056
    %v1153 = vpack.c.b16 %v1057, %v1057
    %v1154 = vpack.c.b16 %v1058, %v1058
    %v1155 = vpack.c.b16 %v1059, %v1059
    %v1156 = vpack.c.b16 %v1060, %v1060
    %v1157 = vpack.c.b16 %v1061, %v1061
    %v1158 = vpack.c.b16 %v1062, %v1062
    %v1159 = vpack.c.b16 %v1063, %v1063
    %v1160 = vpack.c.b16 %v1064, %v1064
    %v1161 = vpack.c.b16 %v1065, %v1065
    %v1162 = vpack.c.b16 %v1066, %v1066
    %v1163 = vpack.c.b16 %v1067, %v1067
    %v1164 = vpack.c.b16 %v1068, %v1068
    %v1165 = vpack.c.b16 %v1069, %v1069
    %v1166 = vpack.c.b16 %v1070, %v1070
    %v1167 = vpack.c.b16 %v1071, %v1071
    %v1168 = vpack.c.b16 %v1072, %v1072
    %v1169 = vpack.c.b16 %v1073, %v1073
    %v1170 = vpack.c.b16 %v1074, %v1074
    %v1171 = vpack.c.b16 %v1075, %v1075
    %v1172 = vpack.c.b16 %v1076, %v1076
    %v1173 = vpack.c.b16 %v1077, %v1077
    %v1174 = vpack.c.b16 %v1078, %v1078
    %v1175 = vpack.c.b16 %v1079, %v1079
    %v1176 = vpack.c.b16 %v1080, %v1080
    %v1177 = vpack.c.b16 %v1081, %v1081
    %v1178 = vpack.c.b16 %v1082, %v1082
    %v1179 = vpack.c.b16 %v1083, %v1083
    %v1180 = vpack.c.b16 %v1084, %v1084
    %v1181 = vpack.c.b16 %v1085, %v1085
    %v1182 = vpack.c.b16 %v1086, %v1086
    %v1183 = vpack.c.b16 %v1087, %v1087
    %v1184 = vpack.c.b16 %v1088, %v1088
    %v1185 = vpack.c.b16 %v1089, %v1089
    %v1186 = vpack.c.b16 %v1090, %v1090
    %v1187 = vpack.c.b16 %v1091, %v1091
    %v1188 = vpack.c.b16 %v1092, %v1092
    %v1189 = vpack.c.b16 %v1093, %v1093
    %v1190 = vpack.c.b16 %v1094, %v1094
    %v1191 = vpack.c.b16 %v1095, %v1095
    %v1192 = vpack.c.b16 %v1096, %v1096
    %v1193 = vpack.c.b16 %v1097, %v1097
    %1290 = vst [vmem:[#allocation7] sm:$0xf] %v1098
    %1291 = vst [vmem:[#allocation7 + $0x4] sm:$0xf] %v1099
    %1292 = vst [vmem:[#allocation7 + $0x8] sm:$0xf] %v1100
    %1293 = vst [vmem:[#allocation7 + $0xc] sm:$0xf] %v1101
    %1294 = vst [vmem:[#allocation7 + $0x10] sm:$0xf] %v1102
    %1295 = vst [vmem:[#allocation7 + $0x14] sm:$0xf] %v1103
    %1296 = vst [vmem:[#allocation7 + $0x18] sm:$0xf] %v1104
    %1297 = vst [vmem:[#allocation7 + $0x1c] sm:$0xf] %v1105
    %1298 = vst [vmem:[#allocation7 + $0x20] sm:$0xf] %v1106
    %1299 = vst [vmem:[#allocation7 + $0x24] sm:$0xf] %v1107
    %1300 = vst [vmem:[#allocation7 + $0x28] sm:$0xf] %v1108
    %1301 = vst [vmem:[#allocation7 + $0x2c] sm:$0xf] %v1109
    %1302 = vst [vmem:[#allocation7 + $0x30] sm:$0xf] %v1110
    %1303 = vst [vmem:[#allocation7 + $0x34] sm:$0xf] %v1111
    %1304 = vst [vmem:[#allocation7 + $0x38] sm:$0xf] %v1112
    %1305 = vst [vmem:[#allocation7 + $0x3c] sm:$0xf] %v1113
    %1306 = vst [vmem:[#allocation7 + $0x40] sm:$0xf] %v1114
    %1307 = vst [vmem:[#allocation7 + $0x44] sm:$0xf] %v1115
    %1308 = vst [vmem:[#allocation7 + $0x48] sm:$0xf] %v1116
    %1309 = vst [vmem:[#allocation7 + $0x4c] sm:$0xf] %v1117
    %1310 = vst [vmem:[#allocation7 + $0x50] sm:$0xf] %v1118
    %1311 = vst [vmem:[#allocation7 + $0x54] sm:$0xf] %v1119
    %1312 = vst [vmem:[#allocation7 + $0x58] sm:$0xf] %v1120
    %1313 = vst [vmem:[#allocation7 + $0x5c] sm:$0xf] %v1121
    %1314 = vst [vmem:[#allocation7 + $0x60] sm:$0xf] %v1122
    %1315 = vst [vmem:[#allocation7 + $0x64] sm:$0xf] %v1123
    %1316 = vst [vmem:[#allocation7 + $0x68] sm:$0xf] %v1124
    %1317 = vst [vmem:[#allocation7 + $0x6c] sm:$0xf] %v1125
    %1318 = vst [vmem:[#allocation7 + $0x70] sm:$0xf] %v1126
    %1319 = vst [vmem:[#allocation7 + $0x74] sm:$0xf] %v1127
    %1320 = vst [vmem:[#allocation7 + $0x78] sm:$0xf] %v1128
    %1321 = vst [vmem:[#allocation7 + $0x7c] sm:$0xf] %v1129
    %1322 = vst [vmem:[#allocation7 + $0x80] sm:$0xf] %v1130
    %1323 = vst [vmem:[#allocation7 + $0x84] sm:$0xf] %v1131
    %1324 = vst [vmem:[#allocation7 + $0x88] sm:$0xf] %v1132
    %1325 = vst [vmem:[#allocation7 + $0x8c] sm:$0xf] %v1133
    %1326 = vst [vmem:[#allocation7 + $0x90] sm:$0xf] %v1134
    %1327 = vst [vmem:[#allocation7 + $0x94] sm:$0xf] %v1135
    %1328 = vst [vmem:[#allocation7 + $0x98] sm:$0xf] %v1136
    %1329 = vst [vmem:[#allocation7 + $0x9c] sm:$0xf] %v1137
    %1330 = vst [vmem:[#allocation7 + $0xa0] sm:$0xf] %v1138
    %1331 = vst [vmem:[#allocation7 + $0xa4] sm:$0xf] %v1139
    %1332 = vst [vmem:[#allocation7 + $0xa8] sm:$0xf] %v1140
    %1333 = vst [vmem:[#allocation7 + $0xac] sm:$0xf] %v1141
    %1334 = vst [vmem:[#allocation7 + $0xb0] sm:$0xf] %v1142
    %1335 = vst [vmem:[#allocation7 + $0xb4] sm:$0xf] %v1143
    %1336 = vst [vmem:[#allocation7 + $0xb8] sm:$0xf] %v1144
    %1337 = vst [vmem:[#allocation7 + $0xbc] sm:$0xf] %v1145
    %1338 = vst [vmem:[#allocation7 + $0xc0] sm:$0xf] %v1146
    %1339 = vst [vmem:[#allocation7 + $0xc4] sm:$0xf] %v1147
    %1340 = vst [vmem:[#allocation7 + $0xc8] sm:$0xf] %v1148
    %1341 = vst [vmem:[#allocation7 + $0xcc] sm:$0xf] %v1149
    %1342 = vst [vmem:[#allocation7 + $0xd0] sm:$0xf] %v1150
    %1343 = vst [vmem:[#allocation7 + $0xd4] sm:$0xf] %v1151
    %1344 = vst [vmem:[#allocation7 + $0xd8] sm:$0xf] %v1152
    %1345 = vst [vmem:[#allocation7 + $0xdc] sm:$0xf] %v1153
    %1346 = vst [vmem:[#allocation7 + $0xe0] sm:$0xf] %v1154
    %1347 = vst [vmem:[#allocation7 + $0xe4] sm:$0xf] %v1155
    %1348 = vst [vmem:[#allocation7 + $0xe8] sm:$0xf] %v1156
    %1349 = vst [vmem:[#allocation7 + $0xec] sm:$0xf] %v1157
    %1350 = vst [vmem:[#allocation7 + $0xf0] sm:$0xf] %v1158
    %1351 = vst [vmem:[#allocation7 + $0xf4] sm:$0xf] %v1159
    %1352 = vst [vmem:[#allocation7 + $0xf8] sm:$0xf] %v1160
    %1353 = vst [vmem:[#allocation7 + $0xfc] sm:$0xf] %v1161
    %1354 = vst [vmem:[#allocation7 + $0x100] sm:$0xf] %v1162
    %1355 = vst [vmem:[#allocation7 + $0x104] sm:$0xf] %v1163
    %1356 = vst [vmem:[#allocation7 + $0x108] sm:$0xf] %v1164
    %1357 = vst [vmem:[#allocation7 + $0x10c] sm:$0xf] %v1165
    %1358 = vst [vmem:[#allocation7 + $0x110] sm:$0xf] %v1166
    %1359 = vst [vmem:[#allocation7 + $0x114] sm:$0xf] %v1167
    %1360 = vst [vmem:[#allocation7 + $0x118] sm:$0xf] %v1168
    %1361 = vst [vmem:[#allocation7 + $0x11c] sm:$0xf] %v1169
    %1362 = vst [vmem:[#allocation7 + $0x120] sm:$0xf] %v1170
    %1363 = vst [vmem:[#allocation7 + $0x124] sm:$0xf] %v1171
    %1364 = vst [vmem:[#allocation7 + $0x128] sm:$0xf] %v1172
    %1365 = vst [vmem:[#allocation7 + $0x12c] sm:$0xf] %v1173
    %1366 = vst [vmem:[#allocation7 + $0x130] sm:$0xf] %v1174
    %1367 = vst [vmem:[#allocation7 + $0x134] sm:$0xf] %v1175
    %1368 = vst [vmem:[#allocation7 + $0x138] sm:$0xf] %v1176
    %1369 = vst [vmem:[#allocation7 + $0x13c] sm:$0xf] %v1177
    %1370 = vst [vmem:[#allocation7 + $0x140] sm:$0xf] %v1178
    %1371 = vst [vmem:[#allocation7 + $0x144] sm:$0xf] %v1179
    %1372 = vst [vmem:[#allocation7 + $0x148] sm:$0xf] %v1180
    %1373 = vst [vmem:[#allocation7 + $0x14c] sm:$0xf] %v1181
    %1374 = vst [vmem:[#allocation7 + $0x150] sm:$0xf] %v1182
    %1375 = vst [vmem:[#allocation7 + $0x154] sm:$0xf] %v1183
    %1376 = vst [vmem:[#allocation7 + $0x158] sm:$0xf] %v1184
    %1377 = vst [vmem:[#allocation7 + $0x15c] sm:$0xf] %v1185
    %1378 = vst [vmem:[#allocation7 + $0x160] sm:$0xf] %v1186
    %1379 = vst [vmem:[#allocation7 + $0x164] sm:$0xf] %v1187
    %1380 = vst [vmem:[#allocation7 + $0x168] sm:$0xf] %v1188
    %1381 = vst [vmem:[#allocation7 + $0x16c] sm:$0xf] %v1189
    %1382 = vst [vmem:[#allocation7 + $0x170] sm:$0xf] %v1190
    %1383 = vst [vmem:[#allocation7 + $0x174] sm:$0xf] %v1191
    %1384 = vst [vmem:[#allocation7 + $0x178] sm:$0xf] %v1192
    %1385 = vst [vmem:[#allocation7 + $0x17c] sm:$0xf] %v1193
    // Predicated region
    $region18: #{tpu_custom_call.1} parent=1 // pred_check
      _
    $region19: #{tpu_custom_call.1} parent=1 // pred_check_branch
      %1387 = sbr.rel (0) target = $region21
    $region20: #{tpu_custom_call.1} parent=1 // pred_region
      %s1389 = ssub.s32 6144, 6144
      %1390 = vsyncadd [#allocation4], %s1389
      %s1391 = sshll.u32 [#allocation7], 4
      %s1392 = int_to_ptr.vmem [resolvable:$true] %s1391
      %1397 = dma.vmem_to_hbm [thread:$0]  %s1392, 6144, %s2, [#allocation4], 64, 64, 4
    $region21: #{tpu_custom_call.1} parent=1 // pred_fallthru
      _
    // Predicated region
    $region22: #{tpu_custom_call.1} parent=1 // pred_check
      _
    $region23: #{tpu_custom_call.1} parent=1 // pred_check_branch
      %1399 = sbr.rel (0) target = $region25
    $region24: #{tpu_custom_call.1} parent=1 // pred_region
      %1400 = dma.done [#allocation4], 6144
    $region25: #{tpu_custom_call.1} parent=1 // pred_fallthru
      _
    %1401 = vsyncpa [#allocation3], 1
    %1402 = vsyncpa [#allocation6], 1
    %1403 = vsyncpa [#allocation4], 1

</llo_original>
